<compile_context>
chip_gen: v7x
topology: tpu7x:2x2x1
jax: 0.10.0
libtpu: 0.0.40
codegen_flags: <defaults>
</compile_context>

<pallas_src>
import jax
import jax.numpy as jnp
from jax.experimental import pallas as pl
from jax.experimental.pallas import tpu as pltpu


def ffnet_kernel(x_ref,
                 w1, b1, w2, b2, w3, b3, w4, b4, w5, b5, w6, b6,
                 o_ref):
    # x_ref: (input_len, TILE_B) bf16, feature-major (batch on lanes).
    h = x_ref[...]
    # fc1..fc5: W @ h + b, ReLU, back to bf16 for the next MXU pass.
    for w, b in ((w1, b1), (w2, b2), (w3, b3), (w4, b4), (w5, b5)):
        y = jnp.dot(w[...], h, preferred_element_type=jnp.float32) + b[...]
        h = jnp.maximum(y, 0.0).astype(jnp.bfloat16)
    # fc6: tiny M=1 matmul, lane-dense (1, TILE_B) result, f32 store.
    o_ref[...] = jnp.dot(w6[...], h, preferred_element_type=jnp.float32) + b6[...]


def _round_up(x, m):
    return ((x + m - 1) // m) * m


def ffnet_forward(x, params, tile_b=512):
    """x: (B, input_len) float32.
    params: [W1, b1, ..., W6, b6] in PyTorch layout (W_i: (out, in), b_i: (out,)).
    Returns (B, 1) float32."""
    B, input_len = x.shape

    # Batch tile: multiple of 128 (lane width), capped so tiny demos use one tile.
    tile_b = max(128, (int(tile_b) // 128) * 128)
    tile_b = min(tile_b, _round_up(B, 128))
    n_tiles = pl.cdiv(B, tile_b)
    b_pad = n_tiles * tile_b

    # Feature-major, bf16 MXU inputs; zero-pad the batch tail.
    x_t = jnp.transpose(x).astype(jnp.bfloat16)                 # (input_len, B)
    x_t = jnp.pad(x_t, ((0, 0), (0, b_pad - B)))                # (input_len, b_pad)

    ws = [params[2 * i].astype(jnp.bfloat16) for i in range(6)]                 # (out, in)
    bs = [params[2 * i + 1].astype(jnp.float32).reshape(-1, 1) for i in range(6)]  # (out, 1)

    operands = [x_t]
    in_specs = [pl.BlockSpec((input_len, tile_b), lambda j: (0, j))]
    for w, b in zip(ws, bs):
        operands += [w, b]
        # Full-array blocks with a constant index_map -> resident across grid steps.
        in_specs += [pl.BlockSpec(w.shape, lambda j: (0, 0)),
                     pl.BlockSpec(b.shape, lambda j: (0, 0))]

    flops = 2 * B * sum(w.shape[0] * w.shape[1] for w in ws)
    bytes_accessed = (x_t.size * 2 + b_pad * 4
                      + sum(w.size * 2 for w in ws) + sum(b.size * 4 for b in bs))

    out_t = pl.pallas_call(
        ffnet_kernel,
        out_shape=jax.ShapeDtypeStruct((1, b_pad), jnp.float32),
        grid=(n_tiles,),
        in_specs=in_specs,
        out_specs=pl.BlockSpec((1, tile_b), lambda j: (0, j)),
        compiler_params=pltpu.CompilerParams(
            dimension_semantics=("parallel",),
            vmem_limit_bytes=32 * 1024 * 1024),
        cost_estimate=pl.CostEstimate(
            flops=int(flops), transcendentals=0, bytes_accessed=int(bytes_accessed)),
    )(*operands)

    return jnp.transpose(out_t[:, :B])                          # (B, 1)


def init_params(key, input_len):
    """PyTorch nn.Linear-style params: W_i (out, in), b_i (out,), U(-1/sqrt(in), 1/sqrt(in))."""
    dims = [input_len, 256, 128, 64, 64, 32, 1]
    params = []
    for i in range(6):
        fan_in, fan_out = dims[i], dims[i + 1]
        key, kw, kb = jax.random.split(key, 3)
        bound = 1.0 / (fan_in ** 0.5)
        w = jax.random.uniform(kw, (fan_out, fan_in), jnp.float32, -bound, bound)
        b = jax.random.uniform(kb, (fan_out,), jnp.float32, -bound, bound)
        params += [w, b]
    return params


def ffnet_reference(x, params):
    """Pure-JAX reference mirroring the kernel's numerics (bf16 inputs, f32 accumulate)."""
    h = x.astype(jnp.bfloat16)
    out = None
    for i in range(6):
        w = params[2 * i].astype(jnp.bfloat16)
        b = params[2 * i + 1].astype(jnp.float32)
        y = jnp.dot(h, w.T, preferred_element_type=jnp.float32) + b
        if i < 5:
            h = jnp.maximum(y, 0.0).astype(jnp.bfloat16)
        else:
            out = y
    return out


if __name__ == "__main__":
    key = jax.random.PRNGKey(0)
    input_len = 64
    kx, kx2, kp = jax.random.split(key, 3)
    params = init_params(kp, input_len)

    # Small batch: pads to a single 128-wide tile.
    x = jax.random.normal(kx, (8, input_len), jnp.float32)
    out = jax.block_until_ready(ffnet_forward(x, params))
    ref = ffnet_reference(x, params)
    assert out.shape == (8, 1), out.shape
    assert jnp.allclose(out, ref, atol=1e-2, rtol=1e-2), (out, ref)

    # Batch not divisible by the tile: exercises grid > 1, resident weights, tail padding.
    x2 = jax.random.normal(kx2, (300, input_len), jnp.float32)
    out2 = jax.block_until_ready(ffnet_forward(x2, params, tile_b=128))
    ref2 = ffnet_reference(x2, params)
    assert out2.shape == (300, 1), out2.shape
    assert jnp.allclose(out2, ref2, atol=1e-2, rtol=1e-2), (out2, ref2)

    print("KERNEL_OK")
</pallas_src>

<mosaic_0001>
module attributes {stable_mosaic.version = 11 : i64} {
  func.func @ffnet_kernel(%arg0: i32, %arg1: memref<64x128xbf16, #tpu.memory_space<vmem>>, %arg2: memref<256x64xbf16, #tpu.memory_space<vmem>>, %arg3: memref<256x1xf32, #tpu.memory_space<vmem>>, %arg4: memref<128x256xbf16, #tpu.memory_space<vmem>>, %arg5: memref<128x1xf32, #tpu.memory_space<vmem>>, %arg6: memref<64x128xbf16, #tpu.memory_space<vmem>>, %arg7: memref<64x1xf32, #tpu.memory_space<vmem>>, %arg8: memref<64x64xbf16, #tpu.memory_space<vmem>>, %arg9: memref<64x1xf32, #tpu.memory_space<vmem>>, %arg10: memref<32x64xbf16, #tpu.memory_space<vmem>>, %arg11: memref<32x1xf32, #tpu.memory_space<vmem>>, %arg12: memref<1x32xbf16, #tpu.memory_space<vmem>>, %arg13: memref<1x1xf32, #tpu.memory_space<vmem>>, %arg14: memref<1x128xf32, #tpu.memory_space<vmem>>) attributes {dimension_semantics = [#tpu.dimension_semantics<parallel>], iteration_bounds = array<i64: 1>, scalar_prefetch = 0 : i64, scratch_operands = 0 : i64, tpu.core_type = #tpu.core_type<tc>, window_params = [{transform_indices = @transform_0, window_bounds = array<i64: 64, 128>}, {pipeline_mode = #tpu.pipeline_mode<synchronous>, transform_indices = @transform_1, window_bounds = array<i64: 256, 64>}, {pipeline_mode = #tpu.pipeline_mode<synchronous>, transform_indices = @transform_2, window_bounds = array<i64: 256, 1>}, {pipeline_mode = #tpu.pipeline_mode<synchronous>, transform_indices = @transform_3, window_bounds = array<i64: 128, 256>}, {pipeline_mode = #tpu.pipeline_mode<synchronous>, transform_indices = @transform_4, window_bounds = array<i64: 128, 1>}, {pipeline_mode = #tpu.pipeline_mode<synchronous>, transform_indices = @transform_5, window_bounds = array<i64: 64, 128>}, {pipeline_mode = #tpu.pipeline_mode<synchronous>, transform_indices = @transform_6, window_bounds = array<i64: 64, 1>}, {pipeline_mode = #tpu.pipeline_mode<synchronous>, transform_indices = @transform_7, window_bounds = array<i64: 64, 64>}, {pipeline_mode = #tpu.pipeline_mode<synchronous>, transform_indices = @transform_8, window_bounds = array<i64: 64, 1>}, {pipeline_mode = #tpu.pipeline_mode<synchronous>, transform_indices = @transform_9, window_bounds = array<i64: 32, 64>}, {pipeline_mode = #tpu.pipeline_mode<synchronous>, transform_indices = @transform_10, window_bounds = array<i64: 32, 1>}, {pipeline_mode = #tpu.pipeline_mode<synchronous>, transform_indices = @transform_11, window_bounds = array<i64: 1, 32>}, {pipeline_mode = #tpu.pipeline_mode<synchronous>, transform_indices = @transform_12, window_bounds = array<i64: 1, 1>}, {transform_indices = @transform_13, window_bounds = array<i64: 1, 128>}]} {
    %c0 = arith.constant 0 : index
    %c0_0 = arith.constant 0 : index
    %0 = vector.load %arg1[%c0, %c0_0] : memref<64x128xbf16, #tpu.memory_space<vmem>>, vector<64x128xbf16>
    %c0_1 = arith.constant 0 : index
    %c0_2 = arith.constant 0 : index
    %1 = vector.load %arg2[%c0_1, %c0_2] : memref<256x64xbf16, #tpu.memory_space<vmem>>, vector<256x64xbf16>
    %cst = arith.constant dense<0.000000e+00> : vector<256x128xf32>
    %2 = tpu.matmul %1, %0, %cst {dimension_numbers = #tpu.dot_dimension_numbers<[1], [0], [0], [1], [0, 0, 1, 1], [], []>} : vector<256x64xbf16>, vector<64x128xbf16>, vector<256x128xf32> -> vector<256x128xf32>
    %c0_3 = arith.constant 0 : index
    %c0_4 = arith.constant 0 : index
    %3 = vector.load %arg3[%c0_3, %c0_4] : memref<256x1xf32, #tpu.memory_space<vmem>>, vector<256x1xf32>
    %4 = vector.broadcast %3 : vector<256x1xf32> to vector<256x128xf32>
    %5 = arith.addf %2, %4 : vector<256x128xf32>
    %cst_5 = arith.constant 0.000000e+00 : f32
    %6 = vector.broadcast %cst_5 : f32 to vector<256x128xf32>
    %7 = arith.maximumf %5, %6 : vector<256x128xf32>
    %8 = arith.truncf %7 : vector<256x128xf32> to vector<256x128xbf16>
    %c0_6 = arith.constant 0 : index
    %c0_7 = arith.constant 0 : index
    %9 = vector.load %arg4[%c0_6, %c0_7] : memref<128x256xbf16, #tpu.memory_space<vmem>>, vector<128x256xbf16>
    %cst_8 = arith.constant dense<0.000000e+00> : vector<128x128xf32>
    %10 = tpu.matmul %9, %8, %cst_8 {dimension_numbers = #tpu.dot_dimension_numbers<[1], [0], [0], [1], [0, 0, 1, 1], [], []>} : vector<128x256xbf16>, vector<256x128xbf16>, vector<128x128xf32> -> vector<128x128xf32>
    %c0_9 = arith.constant 0 : index
    %c0_10 = arith.constant 0 : index
    %11 = vector.load %arg5[%c0_9, %c0_10] : memref<128x1xf32, #tpu.memory_space<vmem>>, vector<128x1xf32>
    %12 = vector.broadcast %11 : vector<128x1xf32> to vector<128x128xf32>
    %13 = arith.addf %10, %12 : vector<128x128xf32>
    %cst_11 = arith.constant 0.000000e+00 : f32
    %14 = vector.broadcast %cst_11 : f32 to vector<128x128xf32>
    %15 = arith.maximumf %13, %14 : vector<128x128xf32>
    %16 = arith.truncf %15 : vector<128x128xf32> to vector<128x128xbf16>
    %c0_12 = arith.constant 0 : index
    %c0_13 = arith.constant 0 : index
    %17 = vector.load %arg6[%c0_12, %c0_13] : memref<64x128xbf16, #tpu.memory_space<vmem>>, vector<64x128xbf16>
    %cst_14 = arith.constant dense<0.000000e+00> : vector<64x128xf32>
    %18 = tpu.matmul %17, %16, %cst_14 {dimension_numbers = #tpu.dot_dimension_numbers<[1], [0], [0], [1], [0, 0, 1, 1], [], []>} : vector<64x128xbf16>, vector<128x128xbf16>, vector<64x128xf32> -> vector<64x128xf32>
    %c0_15 = arith.constant 0 : index
    %c0_16 = arith.constant 0 : index
    %19 = vector.load %arg7[%c0_15, %c0_16] : memref<64x1xf32, #tpu.memory_space<vmem>>, vector<64x1xf32>
    %20 = vector.broadcast %19 : vector<64x1xf32> to vector<64x128xf32>
    %21 = arith.addf %18, %20 : vector<64x128xf32>
    %cst_17 = arith.constant 0.000000e+00 : f32
    %22 = vector.broadcast %cst_17 : f32 to vector<64x128xf32>
    %23 = arith.maximumf %21, %22 : vector<64x128xf32>
    %24 = arith.truncf %23 : vector<64x128xf32> to vector<64x128xbf16>
    %c0_18 = arith.constant 0 : index
    %c0_19 = arith.constant 0 : index
    %25 = vector.load %arg8[%c0_18, %c0_19] : memref<64x64xbf16, #tpu.memory_space<vmem>>, vector<64x64xbf16>
    %cst_20 = arith.constant dense<0.000000e+00> : vector<64x128xf32>
    %26 = tpu.matmul %25, %24, %cst_20 {dimension_numbers = #tpu.dot_dimension_numbers<[1], [0], [0], [1], [0, 0, 1, 1], [], []>} : vector<64x64xbf16>, vector<64x128xbf16>, vector<64x128xf32> -> vector<64x128xf32>
    %c0_21 = arith.constant 0 : index
    %c0_22 = arith.constant 0 : index
    %27 = vector.load %arg9[%c0_21, %c0_22] : memref<64x1xf32, #tpu.memory_space<vmem>>, vector<64x1xf32>
    %28 = vector.broadcast %27 : vector<64x1xf32> to vector<64x128xf32>
    %29 = arith.addf %26, %28 : vector<64x128xf32>
    %cst_23 = arith.constant 0.000000e+00 : f32
    %30 = vector.broadcast %cst_23 : f32 to vector<64x128xf32>
    %31 = arith.maximumf %29, %30 : vector<64x128xf32>
    %32 = arith.truncf %31 : vector<64x128xf32> to vector<64x128xbf16>
    %c0_24 = arith.constant 0 : index
    %c0_25 = arith.constant 0 : index
    %33 = vector.load %arg10[%c0_24, %c0_25] : memref<32x64xbf16, #tpu.memory_space<vmem>>, vector<32x64xbf16>
    %cst_26 = arith.constant dense<0.000000e+00> : vector<32x128xf32>
    %34 = tpu.matmul %33, %32, %cst_26 {dimension_numbers = #tpu.dot_dimension_numbers<[1], [0], [0], [1], [0, 0, 1, 1], [], []>} : vector<32x64xbf16>, vector<64x128xbf16>, vector<32x128xf32> -> vector<32x128xf32>
    %c0_27 = arith.constant 0 : index
    %c0_28 = arith.constant 0 : index
    %35 = vector.load %arg11[%c0_27, %c0_28] : memref<32x1xf32, #tpu.memory_space<vmem>>, vector<32x1xf32>
    %36 = vector.broadcast %35 : vector<32x1xf32> to vector<32x128xf32>
    %37 = arith.addf %34, %36 : vector<32x128xf32>
    %cst_29 = arith.constant 0.000000e+00 : f32
    %38 = vector.broadcast %cst_29 : f32 to vector<32x128xf32>
    %39 = arith.maximumf %37, %38 : vector<32x128xf32>
    %40 = arith.truncf %39 : vector<32x128xf32> to vector<32x128xbf16>
    %c0_30 = arith.constant 0 : index
    %c0_31 = arith.constant 0 : index
    %41 = vector.load %arg12[%c0_30, %c0_31] : memref<1x32xbf16, #tpu.memory_space<vmem>>, vector<1x32xbf16>
    %cst_32 = arith.constant dense<0.000000e+00> : vector<1x128xf32>
    %42 = tpu.matmul %41, %40, %cst_32 {dimension_numbers = #tpu.dot_dimension_numbers<[1], [0], [0], [1], [0, 0, 1, 1], [], []>} : vector<1x32xbf16>, vector<32x128xbf16>, vector<1x128xf32> -> vector<1x128xf32>
    %c0_33 = arith.constant 0 : index
    %c0_34 = arith.constant 0 : index
    %43 = vector.load %arg13[%c0_33, %c0_34] : memref<1x1xf32, #tpu.memory_space<vmem>>, vector<1x1xf32>
    %44 = vector.broadcast %43 : vector<1x1xf32> to vector<1x128xf32>
    %45 = arith.addf %42, %44 : vector<1x128xf32>
    %c0_35 = arith.constant 0 : index
    %c0_36 = arith.constant 0 : index
    %46 = vector.load %arg14[%c0_35, %c0_36] : memref<1x128xf32, #tpu.memory_space<vmem>>, vector<1x128xf32>
    tpu.vector_store %arg14[%c0_35, %c0_36], %45 {strides = array<i32>} : memref<1x128xf32, #tpu.memory_space<vmem>>, vector<1x128xf32>,
    return
  }
  func.func @transform_0(%arg0: i32) -> (i32, i32) {
    %c0_i32 = arith.constant 0 : i32
    %c0_i32_0 = arith.constant 0 : i32
    return %c0_i32, %arg0 : i32, i32
  }
  func.func @transform_1(%arg0: i32) -> (i32, i32) {
    %c0_i32 = arith.constant 0 : i32
    %c0_i32_0 = arith.constant 0 : i32
    %c0_i32_1 = arith.constant 0 : i32
    return %c0_i32, %c0_i32_0 : i32, i32
  }
  func.func @transform_2(%arg0: i32) -> (i32, i32) {
    %c0_i32 = arith.constant 0 : i32
    %c0_i32_0 = arith.constant 0 : i32
    %c0_i32_1 = arith.constant 0 : i32
    return %c0_i32, %c0_i32_0 : i32, i32
  }
  func.func @transform_3(%arg0: i32) -> (i32, i32) {
    %c0_i32 = arith.constant 0 : i32
    %c0_i32_0 = arith.constant 0 : i32
    %c0_i32_1 = arith.constant 0 : i32
    return %c0_i32, %c0_i32_0 : i32, i32
  }
  func.func @transform_4(%arg0: i32) -> (i32, i32) {
    %c0_i32 = arith.constant 0 : i32
    %c0_i32_0 = arith.constant 0 : i32
    %c0_i32_1 = arith.constant 0 : i32
    return %c0_i32, %c0_i32_0 : i32, i32
  }
  func.func @transform_5(%arg0: i32) -> (i32, i32) {
    %c0_i32 = arith.constant 0 : i32
    %c0_i32_0 = arith.constant 0 : i32
    %c0_i32_1 = arith.constant 0 : i32
    return %c0_i32, %c0_i32_0 : i32, i32
  }
  func.func @transform_6(%arg0: i32) -> (i32, i32) {
    %c0_i32 = arith.constant 0 : i32
    %c0_i32_0 = arith.constant 0 : i32
    %c0_i32_1 = arith.constant 0 : i32
    return %c0_i32, %c0_i32_0 : i32, i32
  }
  func.func @transform_7(%arg0: i32) -> (i32, i32) {
    %c0_i32 = arith.constant 0 : i32
    %c0_i32_0 = arith.constant 0 : i32
    %c0_i32_1 = arith.constant 0 : i32
    return %c0_i32, %c0_i32_0 : i32, i32
  }
  func.func @transform_8(%arg0: i32) -> (i32, i32) {
    %c0_i32 = arith.constant 0 : i32
    %c0_i32_0 = arith.constant 0 : i32
    %c0_i32_1 = arith.constant 0 : i32
    return %c0_i32, %c0_i32_0 : i32, i32
  }
  func.func @transform_9(%arg0: i32) -> (i32, i32) {
    %c0_i32 = arith.constant 0 : i32
    %c0_i32_0 = arith.constant 0 : i32
    %c0_i32_1 = arith.constant 0 : i32
    return %c0_i32, %c0_i32_0 : i32, i32
  }
  func.func @transform_10(%arg0: i32) -> (i32, i32) {
    %c0_i32 = arith.constant 0 : i32
    %c0_i32_0 = arith.constant 0 : i32
    %c0_i32_1 = arith.constant 0 : i32
    return %c0_i32, %c0_i32_0 : i32, i32
  }
  func.func @transform_11(%arg0: i32) -> (i32, i32) {
    %c0_i32 = arith.constant 0 : i32
    %c0_i32_0 = arith.constant 0 : i32
    %c0_i32_1 = arith.constant 0 : i32
    return %c0_i32, %c0_i32_0 : i32, i32
  }
  func.func @transform_12(%arg0: i32) -> (i32, i32) {
    %c0_i32 = arith.constant 0 : i32
    %c0_i32_0 = arith.constant 0 : i32
    %c0_i32_1 = arith.constant 0 : i32
    return %c0_i32, %c0_i32_0 : i32, i32
  }
  func.func @transform_13(%arg0: i32) -> (i32, i32) {
    %c0_i32 = arith.constant 0 : i32
    %c0_i32_0 = arith.constant 0 : i32
    return %c0_i32, %arg0 : i32, i32
  }
}

</mosaic_0001>

<llo_original>
// kernel: tpu_custom_call.1
$region0: #{tpu_custom_call.1}
  #allocation0 [shape = 'u32[]', space=smem, size = 0x4, offset = 0x4, fixed_abs, tag = 'smem constant byte address 0x4 - core index']
  #allocation1 [shape = 'u32[144,128]{1,0:T(1,128)}', space=vmem, size = 0x12000, scoped, tag = 'internal scratch']
  #allocation2 [shape = 'f32[1,1]{1,0:T(1,128)S(1)}', space=vmem, size = 0x200, scoped, tag = 'scoped memory for tpu_custom_call.1']
  %s0 = inlined_call_operand.vmem [shape: bf16[64,128], index: 0, kind: input, shape index: {}]
  %s1 = inlined_call_operand.vmem [shape: bf16[256,64], index: 1, kind: input, shape index: {}]
  %s2 = inlined_call_operand.vmem [shape: f32[256,1], index: 2, kind: input, shape index: {}]
  %s3 = inlined_call_operand.vmem [shape: bf16[128,256], index: 3, kind: input, shape index: {}]
  %s4 = inlined_call_operand.vmem [shape: f32[128,1], index: 4, kind: input, shape index: {}]
  %s5 = inlined_call_operand.vmem [shape: bf16[64,128], index: 5, kind: input, shape index: {}]
  %s6 = inlined_call_operand.vmem [shape: f32[64,1], index: 6, kind: input, shape index: {}]
  %s7 = inlined_call_operand.vmem [shape: bf16[64,64], index: 7, kind: input, shape index: {}]
  %s8 = inlined_call_operand.vmem [shape: f32[64,1], index: 8, kind: input, shape index: {}]
  %s9 = inlined_call_operand.vmem [shape: bf16[32,64], index: 9, kind: input, shape index: {}]
  %s10 = inlined_call_operand.vmem [shape: f32[32,1], index: 10, kind: input, shape index: {}]
  %s11 = inlined_call_operand.vmem [shape: bf16[1,32], index: 11, kind: input, shape index: {}]
  %s12 = inlined_call_operand.<no memory space> [shape: f32[1,1], index: 12, kind: input, shape index: {}]
  %s13 = inlined_call_operand.hbm [shape: f32[1,128], index: 13, kind: output, shape index: {}]
  %s14 = sld [smem:[#allocation0]]
  $region62: #{tpu_custom_call.1} parent=0
    _
  %s16 = ssub.s32 1, %s14
  %s17 = scalar_select 0, %s16, %s14
  %v18 = vstv %s12
  %19 = vst [vmem:[#allocation2] sm:$0x1] %v18
  $region1: #{tpu_custom_call.1} parent=0
    #allocation3 [shape = 'u8[512]{0}', space=vmem, size = 0x400, scoped, tag = 'output window, operand 0, single buffered']
    #allocation4 [shape = 's32[1]{0}', space=sflag, size = 0x4, scoped, tag = 'scoped memory for tpu_custom_call.1']
    %20 = vsyncpa [#allocation4], 0
    // Predicated region
    $region2: #{tpu_custom_call.1} parent=1 // pred_check
      _
    $region3: #{tpu_custom_call.1} parent=1 // pred_check_branch
      %22 = sbr.rel (0) target = $region5
    $region4: #{tpu_custom_call.1} parent=1 // pred_region
      _
    $region5: #{tpu_custom_call.1} parent=1 // pred_fallthru
      _
    // Predicated region
    $region6: #{tpu_custom_call.1} parent=1 // pred_check
      _
    $region7: #{tpu_custom_call.1} parent=1 // pred_check_branch
      %24 = sbr.rel (0) target = $region9
    $region8: #{tpu_custom_call.1} parent=1 // pred_region
      _
    $region9: #{tpu_custom_call.1} parent=1 // pred_fallthru
      _
    // Predicated region
    $region10: #{tpu_custom_call.1} parent=1 // pred_check
      _
    $region11: #{tpu_custom_call.1} parent=1 // pred_check_branch
      %26 = sbr.rel (0) target = $region13
    $region12: #{tpu_custom_call.1} parent=1 // pred_region
      _
    $region13: #{tpu_custom_call.1} parent=1 // pred_fallthru
      _
    // Predicated region
    $region14: #{tpu_custom_call.1} parent=1 // pred_check
      _
    $region15: #{tpu_custom_call.1} parent=1 // pred_check_branch
      %28 = sbr.rel (0) target = $region17
    $region16: #{tpu_custom_call.1} parent=1 // pred_region
      _
    $region17: #{tpu_custom_call.1} parent=1 // pred_fallthru
      _
    // Predicated region
    $region18: #{tpu_custom_call.1} parent=1 // pred_check
      _
    $region19: #{tpu_custom_call.1} parent=1 // pred_check_branch
      %30 = sbr.rel (0) target = $region21
    $region20: #{tpu_custom_call.1} parent=1 // pred_region
      _
    $region21: #{tpu_custom_call.1} parent=1 // pred_fallthru
      _
    // Predicated region
    $region22: #{tpu_custom_call.1} parent=1 // pred_check
      _
    $region23: #{tpu_custom_call.1} parent=1 // pred_check_branch
      %32 = sbr.rel (0) target = $region25
    $region24: #{tpu_custom_call.1} parent=1 // pred_region
      _
    $region25: #{tpu_custom_call.1} parent=1 // pred_fallthru
      _
    // Predicated region
    $region26: #{tpu_custom_call.1} parent=1 // pred_check
      _
    $region27: #{tpu_custom_call.1} parent=1 // pred_check_branch
      %34 = sbr.rel (0) target = $region29
    $region28: #{tpu_custom_call.1} parent=1 // pred_region
      _
    $region29: #{tpu_custom_call.1} parent=1 // pred_fallthru
      _
    // Predicated region
    $region30: #{tpu_custom_call.1} parent=1 // pred_check
      _
    $region31: #{tpu_custom_call.1} parent=1 // pred_check_branch
      %36 = sbr.rel (0) target = $region33
    $region32: #{tpu_custom_call.1} parent=1 // pred_region
      _
    $region33: #{tpu_custom_call.1} parent=1 // pred_fallthru
      _
    // Predicated region
    $region34: #{tpu_custom_call.1} parent=1 // pred_check
      _
    $region35: #{tpu_custom_call.1} parent=1 // pred_check_branch
      %38 = sbr.rel (0) target = $region37
    $region36: #{tpu_custom_call.1} parent=1 // pred_region
      _
    $region37: #{tpu_custom_call.1} parent=1 // pred_fallthru
      _
    // Predicated region
    $region38: #{tpu_custom_call.1} parent=1 // pred_check
      _
    $region39: #{tpu_custom_call.1} parent=1 // pred_check_branch
      %40 = sbr.rel (0) target = $region41
    $region40: #{tpu_custom_call.1} parent=1 // pred_region
      _
    $region41: #{tpu_custom_call.1} parent=1 // pred_fallthru
      _
    // Predicated region
    $region42: #{tpu_custom_call.1} parent=1 // pred_check
      _
    $region43: #{tpu_custom_call.1} parent=1 // pred_check_branch
      %42 = sbr.rel (0) target = $region45
    $region44: #{tpu_custom_call.1} parent=1 // pred_region
      _
    $region45: #{tpu_custom_call.1} parent=1 // pred_fallthru
      _
    // Predicated region
    $region46: #{tpu_custom_call.1} parent=1 // pred_check
      _
    $region47: #{tpu_custom_call.1} parent=1 // pred_check_branch
      %44 = sbr.rel (0) target = $region49
    $region48: #{tpu_custom_call.1} parent=1 // pred_region
      _
    $region49: #{tpu_custom_call.1} parent=1 // pred_fallthru
      _
    // Predicated region
    $region50: #{tpu_custom_call.1} parent=1 // pred_check
      _
    $region51: #{tpu_custom_call.1} parent=1 // pred_check_branch
      %46 = sbr.rel (0) target = $region53
    $region52: #{tpu_custom_call.1} parent=1 // pred_region
      _
    $region53: #{tpu_custom_call.1} parent=1 // pred_fallthru
      _
    %v48 = vld [vmem:[%s0] sm:$0xf]
    %v49 = vld [vmem:[%s0 + $0x4] sm:$0xf]
    %v50 = vld [vmem:[%s0 + $0x8] sm:$0xf]
    %v51 = vld [vmem:[%s0 + $0xc] sm:$0xf]
    %v52 = vld [vmem:[%s0 + $0x10] sm:$0xf]
    %v53 = vld [vmem:[%s0 + $0x14] sm:$0xf]
    %v54 = vld [vmem:[%s0 + $0x18] sm:$0xf]
    %v55 = vld [vmem:[%s0 + $0x1c] sm:$0xf]
    %v56 = vld [vmem:[%s1] sm:$0xf]
    %v57 = vld [vmem:[%s1 + $0x4] sm:$0xf]
    %v58 = vld [vmem:[%s1 + $0x8] sm:$0xf]
    %v59 = vld [vmem:[%s1 + $0xc] sm:$0xf]
    %v60 = vld [vmem:[%s1 + $0x10] sm:$0xf]
    %v61 = vld [vmem:[%s1 + $0x14] sm:$0xf]
    %v62 = vld [vmem:[%s1 + $0x18] sm:$0xf]
    %v63 = vld [vmem:[%s1 + $0x1c] sm:$0xf]
    %v64 = vld [vmem:[%s1 + $0x20] sm:$0xf]
    %v65 = vld [vmem:[%s1 + $0x24] sm:$0xf]
    %v66 = vld [vmem:[%s1 + $0x28] sm:$0xf]
    %v67 = vld [vmem:[%s1 + $0x2c] sm:$0xf]
    %v68 = vld [vmem:[%s1 + $0x30] sm:$0xf]
    %v69 = vld [vmem:[%s1 + $0x34] sm:$0xf]
    %v70 = vld [vmem:[%s1 + $0x38] sm:$0xf]
    %v71 = vld [vmem:[%s1 + $0x3c] sm:$0xf]
    %v72 = vld [vmem:[%s1 + $0x40] sm:$0xf]
    %v73 = vld [vmem:[%s1 + $0x44] sm:$0xf]
    %v74 = vld [vmem:[%s1 + $0x48] sm:$0xf]
    %v75 = vld [vmem:[%s1 + $0x4c] sm:$0xf]
    %v76 = vld [vmem:[%s1 + $0x50] sm:$0xf]
    %v77 = vld [vmem:[%s1 + $0x54] sm:$0xf]
    %v78 = vld [vmem:[%s1 + $0x58] sm:$0xf]
    %v79 = vld [vmem:[%s1 + $0x5c] sm:$0xf]
    %v80 = vld [vmem:[%s1 + $0x60] sm:$0xf]
    %v81 = vld [vmem:[%s1 + $0x64] sm:$0xf]
    %v82 = vld [vmem:[%s1 + $0x68] sm:$0xf]
    %v83 = vld [vmem:[%s1 + $0x6c] sm:$0xf]
    %v84 = vld [vmem:[%s1 + $0x70] sm:$0xf]
    %v85 = vld [vmem:[%s1 + $0x74] sm:$0xf]
    %v86 = vld [vmem:[%s1 + $0x78] sm:$0xf]
    %v87 = vld [vmem:[%s1 + $0x7c] sm:$0xf]
    %v88 = vld [vmem:[%s2] sm:$0xff]
    %v89 = vld [vmem:[%s2 + $0x8] sm:$0xff]
    %v90 = vld [vmem:[%s2 + $0x10] sm:$0xff]
    %v91 = vld [vmem:[%s2 + $0x18] sm:$0xff]
    %v92 = vld [vmem:[%s2 + $0x20] sm:$0xff]
    %v93 = vld [vmem:[%s2 + $0x28] sm:$0xff]
    %v94 = vld [vmem:[%s2 + $0x30] sm:$0xff]
    %v95 = vld [vmem:[%s2 + $0x38] sm:$0xff]
    %v96 = vld [vmem:[%s2 + $0x40] sm:$0xff]
    %v97 = vld [vmem:[%s2 + $0x48] sm:$0xff]
    %v98 = vld [vmem:[%s2 + $0x50] sm:$0xff]
    %v99 = vld [vmem:[%s2 + $0x58] sm:$0xff]
    %v100 = vld [vmem:[%s2 + $0x60] sm:$0xff]
    %v101 = vld [vmem:[%s2 + $0x68] sm:$0xff]
    %v102 = vld [vmem:[%s2 + $0x70] sm:$0xff]
    %v103 = vld [vmem:[%s2 + $0x78] sm:$0xff]
    %v104 = vld [vmem:[%s2 + $0x80] sm:$0xff]
    %v105 = vld [vmem:[%s2 + $0x88] sm:$0xff]
    %v106 = vld [vmem:[%s2 + $0x90] sm:$0xff]
    %v107 = vld [vmem:[%s2 + $0x98] sm:$0xff]
    %v108 = vld [vmem:[%s2 + $0xa0] sm:$0xff]
    %v109 = vld [vmem:[%s2 + $0xa8] sm:$0xff]
    %v110 = vld [vmem:[%s2 + $0xb0] sm:$0xff]
    %v111 = vld [vmem:[%s2 + $0xb8] sm:$0xff]
    %v112 = vld [vmem:[%s2 + $0xc0] sm:$0xff]
    %v113 = vld [vmem:[%s2 + $0xc8] sm:$0xff]
    %v114 = vld [vmem:[%s2 + $0xd0] sm:$0xff]
    %v115 = vld [vmem:[%s2 + $0xd8] sm:$0xff]
    %v116 = vld [vmem:[%s2 + $0xe0] sm:$0xff]
    %v117 = vld [vmem:[%s2 + $0xe8] sm:$0xff]
    %v118 = vld [vmem:[%s2 + $0xf0] sm:$0xff]
    %v119 = vld [vmem:[%s2 + $0xf8] sm:$0xff]
    %121 = vset.pattern.permute.xlu0 0
    %122 = vperm.xlu0 %121, %v88
    %v123 = vpop.permute.xlu0 %122
    %126 = vset.pattern.permute.xlu0 0
    %127 = vperm.xlu0 %126, %v89
    %v128 = vpop.permute.xlu0 %127
    %131 = vset.pattern.permute.xlu0 0
    %132 = vperm.xlu0 %131, %v90
    %v133 = vpop.permute.xlu0 %132
    %136 = vset.pattern.permute.xlu0 0
    %137 = vperm.xlu0 %136, %v91
    %v138 = vpop.permute.xlu0 %137
    %141 = vset.pattern.permute.xlu0 0
    %142 = vperm.xlu0 %141, %v92
    %v143 = vpop.permute.xlu0 %142
    %146 = vset.pattern.permute.xlu0 0
    %147 = vperm.xlu0 %146, %v93
    %v148 = vpop.permute.xlu0 %147
    %151 = vset.pattern.permute.xlu0 0
    %152 = vperm.xlu0 %151, %v94
    %v153 = vpop.permute.xlu0 %152
    %156 = vset.pattern.permute.xlu0 0
    %157 = vperm.xlu0 %156, %v95
    %v158 = vpop.permute.xlu0 %157
    %161 = vset.pattern.permute.xlu0 0
    %162 = vperm.xlu0 %161, %v96
    %v163 = vpop.permute.xlu0 %162
    %166 = vset.pattern.permute.xlu0 0
    %167 = vperm.xlu0 %166, %v97
    %v168 = vpop.permute.xlu0 %167
    %171 = vset.pattern.permute.xlu0 0
    %172 = vperm.xlu0 %171, %v98
    %v173 = vpop.permute.xlu0 %172
    %176 = vset.pattern.permute.xlu0 0
    %177 = vperm.xlu0 %176, %v99
    %v178 = vpop.permute.xlu0 %177
    %181 = vset.pattern.permute.xlu0 0
    %182 = vperm.xlu0 %181, %v100
    %v183 = vpop.permute.xlu0 %182
    %186 = vset.pattern.permute.xlu0 0
    %187 = vperm.xlu0 %186, %v101
    %v188 = vpop.permute.xlu0 %187
    %191 = vset.pattern.permute.xlu0 0
    %192 = vperm.xlu0 %191, %v102
    %v193 = vpop.permute.xlu0 %192
    %196 = vset.pattern.permute.xlu0 0
    %197 = vperm.xlu0 %196, %v103
    %v198 = vpop.permute.xlu0 %197
    %201 = vset.pattern.permute.xlu0 0
    %202 = vperm.xlu0 %201, %v104
    %v203 = vpop.permute.xlu0 %202
    %206 = vset.pattern.permute.xlu0 0
    %207 = vperm.xlu0 %206, %v105
    %v208 = vpop.permute.xlu0 %207
    %211 = vset.pattern.permute.xlu0 0
    %212 = vperm.xlu0 %211, %v106
    %v213 = vpop.permute.xlu0 %212
    %216 = vset.pattern.permute.xlu0 0
    %217 = vperm.xlu0 %216, %v107
    %v218 = vpop.permute.xlu0 %217
    %221 = vset.pattern.permute.xlu0 0
    %222 = vperm.xlu0 %221, %v108
    %v223 = vpop.permute.xlu0 %222
    %226 = vset.pattern.permute.xlu0 0
    %227 = vperm.xlu0 %226, %v109
    %v228 = vpop.permute.xlu0 %227
    %231 = vset.pattern.permute.xlu0 0
    %232 = vperm.xlu0 %231, %v110
    %v233 = vpop.permute.xlu0 %232
    %236 = vset.pattern.permute.xlu0 0
    %237 = vperm.xlu0 %236, %v111
    %v238 = vpop.permute.xlu0 %237
    %241 = vset.pattern.permute.xlu0 0
    %242 = vperm.xlu0 %241, %v112
    %v243 = vpop.permute.xlu0 %242
    %246 = vset.pattern.permute.xlu0 0
    %247 = vperm.xlu0 %246, %v113
    %v248 = vpop.permute.xlu0 %247
    %251 = vset.pattern.permute.xlu0 0
    %252 = vperm.xlu0 %251, %v114
    %v253 = vpop.permute.xlu0 %252
    %256 = vset.pattern.permute.xlu0 0
    %257 = vperm.xlu0 %256, %v115
    %v258 = vpop.permute.xlu0 %257
    %261 = vset.pattern.permute.xlu0 0
    %262 = vperm.xlu0 %261, %v116
    %v263 = vpop.permute.xlu0 %262
    %266 = vset.pattern.permute.xlu0 0
    %267 = vperm.xlu0 %266, %v117
    %v268 = vpop.permute.xlu0 %267
    %271 = vset.pattern.permute.xlu0 0
    %272 = vperm.xlu0 %271, %v118
    %v273 = vpop.permute.xlu0 %272
    %276 = vset.pattern.permute.xlu0 0
    %277 = vperm.xlu0 %276, %v119
    %v278 = vpop.permute.xlu0 %277
    %v312 = vunpack.c.l.b16 %v56
    %v313 = vunpack.c.l.b16 %v57
    %v314 = vunpack.c.l.b16 %v58
    %v315 = vunpack.c.l.b16 %v59
    %v316 = vunpack.c.l.b16 %v60
    %v317 = vunpack.c.l.b16 %v61
    %v318 = vunpack.c.l.b16 %v62
    %v319 = vunpack.c.l.b16 %v63
    %v320 = vunpack.c.l.b16 %v64
    %v321 = vunpack.c.l.b16 %v65
    %v322 = vunpack.c.l.b16 %v66
    %v323 = vunpack.c.l.b16 %v67
    %v324 = vunpack.c.l.b16 %v68
    %v325 = vunpack.c.l.b16 %v69
    %v326 = vunpack.c.l.b16 %v70
    %v327 = vunpack.c.l.b16 %v71
    %v328 = vunpack.c.l.b16 %v72
    %v329 = vunpack.c.l.b16 %v73
    %v330 = vunpack.c.l.b16 %v74
    %v331 = vunpack.c.l.b16 %v75
    %v332 = vunpack.c.l.b16 %v76
    %v333 = vunpack.c.l.b16 %v77
    %v334 = vunpack.c.l.b16 %v78
    %v335 = vunpack.c.l.b16 %v79
    %v336 = vunpack.c.l.b16 %v80
    %v337 = vunpack.c.l.b16 %v81
    %v338 = vunpack.c.l.b16 %v82
    %v339 = vunpack.c.l.b16 %v83
    %v340 = vunpack.c.l.b16 %v84
    %v341 = vunpack.c.l.b16 %v85
    %v342 = vunpack.c.l.b16 %v86
    %v343 = vunpack.c.l.b16 %v87
    %v344 = vpack.c.b16 %v313, %v312
    %v345 = vpack.c.b16 %v315, %v314
    %v346 = vpack.c.b16 %v317, %v316
    %v347 = vpack.c.b16 %v319, %v318
    %v348 = vpack.c.b16 %v321, %v320
    %v349 = vpack.c.b16 %v323, %v322
    %v350 = vpack.c.b16 %v325, %v324
    %v351 = vpack.c.b16 %v327, %v326
    %v352 = vpack.c.b16 %v329, %v328
    %v353 = vpack.c.b16 %v331, %v330
    %v354 = vpack.c.b16 %v333, %v332
    %v355 = vpack.c.b16 %v335, %v334
    %v356 = vpack.c.b16 %v337, %v336
    %v357 = vpack.c.b16 %v339, %v338
    %v358 = vpack.c.b16 %v341, %v340
    %v359 = vpack.c.b16 %v343, %v342
    %v368 = vunpack.c.l.b16 %v48
    %v369 = vunpack.c.l.b16 %v49
    %v370 = vunpack.c.l.b16 %v50
    %v371 = vunpack.c.l.b16 %v51
    %v372 = vunpack.c.l.b16 %v52
    %v373 = vunpack.c.l.b16 %v53
    %v374 = vunpack.c.l.b16 %v54
    %v375 = vunpack.c.l.b16 %v55
    %v376 = vpack.c.b16 %v369, %v368
    %v377 = vpack.c.b16 %v371, %v370
    %v378 = vpack.c.b16 %v373, %v372
    %v379 = vpack.c.b16 %v375, %v374
    %vm384 = vcmask 523264
    %v386 = vsel %vm384, %v344, 0
    %v389 = vsel %vm384, %v345, 0
    %v392 = vsel %vm384, %v346, 0
    %v395 = vsel %vm384, %v347, 0
    %v398 = vsel %vm384, %v348, 0
    %v401 = vsel %vm384, %v349, 0
    %v404 = vsel %vm384, %v350, 0
    %v407 = vsel %vm384, %v351, 0
    %v410 = vsel %vm384, %v352, 0
    %v413 = vsel %vm384, %v353, 0
    %v416 = vsel %vm384, %v354, 0
    %v419 = vsel %vm384, %v355, 0
    %v422 = vsel %vm384, %v356, 0
    %v425 = vsel %vm384, %v357, 0
    %v428 = vsel %vm384, %v358, 0
    %v431 = vsel %vm384, %v359, 0
    %433 = vmatprep.subr.bf16.mxu0 0
    %434 = vmatpush1.bf16.msra.mxu0 %v376
    %435 = vmatprep.subr.bf16.mxu0 0
    %436 = vmatpush1.bf16.msra.mxu0 %v377
    %437 = vmatprep.subr.bf16.mxu0 0
    %438 = vmatpush1.bf16.msra.mxu0 %v378
    %439 = vmatprep.subr.bf16.mxu0 0
    %440 = vmatpush1.bf16.msra.mxu0 %v379
    %441 = vmatprep.subr.bf16.mxu0 0
    %442 = vmatpush1.bf16.msra.mxu0 0
    %443 = vmatprep.subr.bf16.mxu0 0
    %444 = vmatpush1.bf16.msra.mxu0 0
    %445 = vmatprep.subr.bf16.mxu0 0
    %446 = vmatpush1.bf16.msra.mxu0 0
    %447 = vmatprep.subr.bf16.mxu0 0
    %448 = vmatpush1.bf16.msra.mxu0 0
    %449 = vmatprep.subr.bf16.mxu0 0
    %450 = vmatpush1.bf16.msra.mxu0 0
    %451 = vmatprep.subr.bf16.mxu0 0
    %452 = vmatpush1.bf16.msra.mxu0 0
    %453 = vmatprep.subr.bf16.mxu0 0
    %454 = vmatpush1.bf16.msra.mxu0 0
    %455 = vmatprep.subr.bf16.mxu0 0
    %456 = vmatpush1.bf16.msra.mxu0 0
    %457 = vmatprep.subr.bf16.mxu0 0
    %458 = vmatpush1.bf16.msra.mxu0 0
    %459 = vmatprep.subr.bf16.mxu0 0
    %460 = vmatpush1.bf16.msra.mxu0 0
    %461 = vmatprep.subr.bf16.mxu0 0
    %462 = vmatpush1.bf16.msra.mxu0 0
    %463 = vmatprep.subr.bf16.mxu0 0
    %464 = vmatpush1.bf16.msra.mxu0 0
    %465 = vmatprep.mubr.bf16.mxu0 0
    %466 = vmatmul.mubr.bf16.gmra.mrb[0].mxu0 %v386
    %v467 = vpop.f32.mrb[0].mxu0
    %v468 = vadd.f32 %v123, %v467
    %v469 = vpop.f32.mrb[0].mxu0
    %v470 = vpop.f32.mrb[0].mxu0
    %v471 = vadd.f32 %v128, %v470
    %v472 = vpop.f32.mrb[0].mxu0
    %473 = vmatprep.mubr.bf16.mxu0 0
    %474 = vmatmul.mubr.bf16.gmra.mrb[0].mxu0 %v389
    %v475 = vpop.f32.mrb[0].mxu0
    %v476 = vadd.f32 %v133, %v475
    %v477 = vpop.f32.mrb[0].mxu0
    %v478 = vpop.f32.mrb[0].mxu0
    %v479 = vadd.f32 %v138, %v478
    %v480 = vpop.f32.mrb[0].mxu0
    %481 = vmatprep.mubr.bf16.mxu0 0
    %482 = vmatmul.mubr.bf16.gmra.mrb[0].mxu0 %v392
    %v483 = vpop.f32.mrb[0].mxu0
    %v484 = vadd.f32 %v143, %v483
    %v485 = vpop.f32.mrb[0].mxu0
    %v486 = vpop.f32.mrb[0].mxu0
    %v487 = vadd.f32 %v148, %v486
    %v488 = vpop.f32.mrb[0].mxu0
    %489 = vmatprep.mubr.bf16.mxu0 0
    %490 = vmatmul.mubr.bf16.gmra.mrb[0].mxu0 %v395
    %v491 = vpop.f32.mrb[0].mxu0
    %v492 = vadd.f32 %v153, %v491
    %v493 = vpop.f32.mrb[0].mxu0
    %v494 = vpop.f32.mrb[0].mxu0
    %v495 = vadd.f32 %v158, %v494
    %v496 = vpop.f32.mrb[0].mxu0
    %497 = vmatprep.mubr.bf16.mxu0 0
    %498 = vmatmul.mubr.bf16.gmra.mrb[0].mxu0 %v398
    %v499 = vpop.f32.mrb[0].mxu0
    %v500 = vadd.f32 %v163, %v499
    %v501 = vpop.f32.mrb[0].mxu0
    %v502 = vpop.f32.mrb[0].mxu0
    %v503 = vadd.f32 %v168, %v502
    %v504 = vpop.f32.mrb[0].mxu0
    %505 = vmatprep.mubr.bf16.mxu0 0
    %506 = vmatmul.mubr.bf16.gmra.mrb[0].mxu0 %v401
    %v507 = vpop.f32.mrb[0].mxu0
    %v508 = vadd.f32 %v173, %v507
    %v509 = vpop.f32.mrb[0].mxu0
    %v510 = vpop.f32.mrb[0].mxu0
    %v511 = vadd.f32 %v178, %v510
    %v512 = vpop.f32.mrb[0].mxu0
    %513 = vmatprep.mubr.bf16.mxu0 0
    %514 = vmatmul.mubr.bf16.gmra.mrb[0].mxu0 %v404
    %v515 = vpop.f32.mrb[0].mxu0
    %v516 = vadd.f32 %v183, %v515
    %v517 = vpop.f32.mrb[0].mxu0
    %v518 = vpop.f32.mrb[0].mxu0
    %v519 = vadd.f32 %v188, %v518
    %v520 = vpop.f32.mrb[0].mxu0
    %521 = vmatprep.mubr.bf16.mxu0 0
    %522 = vmatmul.mubr.bf16.gmra.mrb[0].mxu0 %v407
    %v523 = vpop.f32.mrb[0].mxu0
    %v524 = vadd.f32 %v193, %v523
    %v525 = vpop.f32.mrb[0].mxu0
    %v526 = vpop.f32.mrb[0].mxu0
    %v527 = vadd.f32 %v198, %v526
    %v528 = vpop.f32.mrb[0].mxu0
    %529 = vmatprep.mubr.bf16.mxu0 0
    %530 = vmatmul.mubr.bf16.gmra.mrb[0].mxu0 %v410
    %v531 = vpop.f32.mrb[0].mxu0
    %v532 = vadd.f32 %v203, %v531
    %v533 = vpop.f32.mrb[0].mxu0
    %v534 = vpop.f32.mrb[0].mxu0
    %v535 = vadd.f32 %v208, %v534
    %v536 = vpop.f32.mrb[0].mxu0
    %537 = vmatprep.mubr.bf16.mxu0 0
    %538 = vmatmul.mubr.bf16.gmra.mrb[0].mxu0 %v413
    %v539 = vpop.f32.mrb[0].mxu0
    %v540 = vadd.f32 %v213, %v539
    %v541 = vpop.f32.mrb[0].mxu0
    %v542 = vpop.f32.mrb[0].mxu0
    %v543 = vadd.f32 %v218, %v542
    %v544 = vpop.f32.mrb[0].mxu0
    %545 = vmatprep.mubr.bf16.mxu0 0
    %546 = vmatmul.mubr.bf16.gmra.mrb[0].mxu0 %v416
    %v547 = vpop.f32.mrb[0].mxu0
    %v548 = vadd.f32 %v223, %v547
    %v549 = vpop.f32.mrb[0].mxu0
    %v550 = vpop.f32.mrb[0].mxu0
    %v551 = vadd.f32 %v228, %v550
    %v552 = vpop.f32.mrb[0].mxu0
    %553 = vmatprep.mubr.bf16.mxu0 0
    %554 = vmatmul.mubr.bf16.gmra.mrb[0].mxu0 %v419
    %v555 = vpop.f32.mrb[0].mxu0
    %v556 = vadd.f32 %v233, %v555
    %v557 = vpop.f32.mrb[0].mxu0
    %v558 = vpop.f32.mrb[0].mxu0
    %v559 = vadd.f32 %v238, %v558
    %v560 = vpop.f32.mrb[0].mxu0
    %561 = vmatprep.mubr.bf16.mxu0 0
    %562 = vmatmul.mubr.bf16.gmra.mrb[0].mxu0 %v422
    %v563 = vpop.f32.mrb[0].mxu0
    %v564 = vadd.f32 %v243, %v563
    %v565 = vpop.f32.mrb[0].mxu0
    %v566 = vpop.f32.mrb[0].mxu0
    %v567 = vadd.f32 %v248, %v566
    %v568 = vpop.f32.mrb[0].mxu0
    %569 = vmatprep.mubr.bf16.mxu0 0
    %570 = vmatmul.mubr.bf16.gmra.mrb[0].mxu0 %v425
    %v571 = vpop.f32.mrb[0].mxu0
    %v572 = vadd.f32 %v253, %v571
    %v573 = vpop.f32.mrb[0].mxu0
    %v574 = vpop.f32.mrb[0].mxu0
    %v575 = vadd.f32 %v258, %v574
    %v576 = vpop.f32.mrb[0].mxu0
    %577 = vmatprep.mubr.bf16.mxu0 0
    %578 = vmatmul.mubr.bf16.gmra.mrb[0].mxu0 %v428
    %v579 = vpop.f32.mrb[0].mxu0
    %v580 = vadd.f32 %v263, %v579
    %v581 = vpop.f32.mrb[0].mxu0
    %v582 = vpop.f32.mrb[0].mxu0
    %v583 = vadd.f32 %v268, %v582
    %v584 = vpop.f32.mrb[0].mxu0
    %585 = vmatprep.mubr.bf16.mxu0 0
    %586 = vmatmul.mubr.bf16.gmra.mrb[0].mxu0 %v431
    %v587 = vpop.f32.mrb[0].mxu0
    %v588 = vadd.f32 %v273, %v587
    %v589 = vpop.f32.mrb[0].mxu0
    %v590 = vpop.f32.mrb[0].mxu0
    %v591 = vadd.f32 %v278, %v590
    %v592 = vpop.f32.mrb[0].mxu0
    %593 = vdwg.mxu0
    %v594 = vmax.f32 %v468, 0.0
    %v595 = vmax.f32 %v471, 0.0
    %v596 = vmax.f32 %v476, 0.0
    %v597 = vmax.f32 %v479, 0.0
    %v598 = vmax.f32 %v484, 0.0
    %v599 = vmax.f32 %v487, 0.0
    %v600 = vmax.f32 %v492, 0.0
    %v601 = vmax.f32 %v495, 0.0
    %v602 = vmax.f32 %v500, 0.0
    %v603 = vmax.f32 %v503, 0.0
    %v604 = vmax.f32 %v508, 0.0
    %v605 = vmax.f32 %v511, 0.0
    %v606 = vmax.f32 %v516, 0.0
    %v607 = vmax.f32 %v519, 0.0
    %v608 = vmax.f32 %v524, 0.0
    %v609 = vmax.f32 %v527, 0.0
    %v610 = vmax.f32 %v532, 0.0
    %v611 = vmax.f32 %v535, 0.0
    %v612 = vmax.f32 %v540, 0.0
    %v613 = vmax.f32 %v543, 0.0
    %v614 = vmax.f32 %v548, 0.0
    %v615 = vmax.f32 %v551, 0.0
    %v616 = vmax.f32 %v556, 0.0
    %v617 = vmax.f32 %v559, 0.0
    %v618 = vmax.f32 %v564, 0.0
    %v619 = vmax.f32 %v567, 0.0
    %v620 = vmax.f32 %v572, 0.0
    %v621 = vmax.f32 %v575, 0.0
    %v622 = vmax.f32 %v580, 0.0
    %v623 = vmax.f32 %v583, 0.0
    %v624 = vmax.f32 %v588, 0.0
    %v625 = vmax.f32 %v591, 0.0
    %v626 = vpack.c.bf16 %v595, %v594
    %v627 = vpack.c.bf16 %v597, %v596
    %v628 = vpack.c.bf16 %v599, %v598
    %v629 = vpack.c.bf16 %v601, %v600
    %v630 = vpack.c.bf16 %v603, %v602
    %v631 = vpack.c.bf16 %v605, %v604
    %v632 = vpack.c.bf16 %v607, %v606
    %v633 = vpack.c.bf16 %v609, %v608
    %v634 = vpack.c.bf16 %v611, %v610
    %v635 = vpack.c.bf16 %v613, %v612
    %v636 = vpack.c.bf16 %v615, %v614
    %v637 = vpack.c.bf16 %v617, %v616
    %v638 = vpack.c.bf16 %v619, %v618
    %v639 = vpack.c.bf16 %v621, %v620
    %v640 = vpack.c.bf16 %v623, %v622
    %v641 = vpack.c.bf16 %v625, %v624
    %v642 = vld [vmem:[%s3] sm:$0xff]
    %v643 = vld [vmem:[%s3 + $0x8] sm:$0xff]
    %v644 = vld [vmem:[%s3 + $0x10] sm:$0xff]
    %v645 = vld [vmem:[%s3 + $0x18] sm:$0xff]
    %v646 = vld [vmem:[%s3 + $0x20] sm:$0xff]
    %v647 = vld [vmem:[%s3 + $0x28] sm:$0xff]
    %v648 = vld [vmem:[%s3 + $0x30] sm:$0xff]
    %v649 = vld [vmem:[%s3 + $0x38] sm:$0xff]
    %v650 = vld [vmem:[%s3 + $0x40] sm:$0xff]
    %v651 = vld [vmem:[%s3 + $0x48] sm:$0xff]
    %v652 = vld [vmem:[%s3 + $0x50] sm:$0xff]
    %v653 = vld [vmem:[%s3 + $0x58] sm:$0xff]
    %v654 = vld [vmem:[%s3 + $0x60] sm:$0xff]
    %v655 = vld [vmem:[%s3 + $0x68] sm:$0xff]
    %v656 = vld [vmem:[%s3 + $0x70] sm:$0xff]
    %v657 = vld [vmem:[%s3 + $0x78] sm:$0xff]
    %v658 = vld [vmem:[%s4] sm:$0xff]
    %v659 = vld [vmem:[%s4 + $0x8] sm:$0xff]
    %v660 = vld [vmem:[%s4 + $0x10] sm:$0xff]
    %v661 = vld [vmem:[%s4 + $0x18] sm:$0xff]
    %v662 = vld [vmem:[%s4 + $0x20] sm:$0xff]
    %v663 = vld [vmem:[%s4 + $0x28] sm:$0xff]
    %v664 = vld [vmem:[%s4 + $0x30] sm:$0xff]
    %v665 = vld [vmem:[%s4 + $0x38] sm:$0xff]
    %v666 = vld [vmem:[%s4 + $0x40] sm:$0xff]
    %v667 = vld [vmem:[%s4 + $0x48] sm:$0xff]
    %v668 = vld [vmem:[%s4 + $0x50] sm:$0xff]
    %v669 = vld [vmem:[%s4 + $0x58] sm:$0xff]
    %v670 = vld [vmem:[%s4 + $0x60] sm:$0xff]
    %v671 = vld [vmem:[%s4 + $0x68] sm:$0xff]
    %v672 = vld [vmem:[%s4 + $0x70] sm:$0xff]
    %v673 = vld [vmem:[%s4 + $0x78] sm:$0xff]
    %675 = vset.pattern.permute.xlu0 0
    %676 = vperm.xlu0 %675, %v658
    %v677 = vpop.permute.xlu0 %676
    %680 = vset.pattern.permute.xlu0 0
    %681 = vperm.xlu0 %680, %v659
    %v682 = vpop.permute.xlu0 %681
    %685 = vset.pattern.permute.xlu0 0
    %686 = vperm.xlu0 %685, %v660
    %v687 = vpop.permute.xlu0 %686
    %690 = vset.pattern.permute.xlu0 0
    %691 = vperm.xlu0 %690, %v661
    %v692 = vpop.permute.xlu0 %691
    %695 = vset.pattern.permute.xlu0 0
    %696 = vperm.xlu0 %695, %v662
    %v697 = vpop.permute.xlu0 %696
    %700 = vset.pattern.permute.xlu0 0
    %701 = vperm.xlu0 %700, %v663
    %v702 = vpop.permute.xlu0 %701
    %705 = vset.pattern.permute.xlu0 0
    %706 = vperm.xlu0 %705, %v664
    %v707 = vpop.permute.xlu0 %706
    %710 = vset.pattern.permute.xlu0 0
    %711 = vperm.xlu0 %710, %v665
    %v712 = vpop.permute.xlu0 %711
    %715 = vset.pattern.permute.xlu0 0
    %716 = vperm.xlu0 %715, %v666
    %v717 = vpop.permute.xlu0 %716
    %720 = vset.pattern.permute.xlu0 0
    %721 = vperm.xlu0 %720, %v667
    %v722 = vpop.permute.xlu0 %721
    %725 = vset.pattern.permute.xlu0 0
    %726 = vperm.xlu0 %725, %v668
    %v727 = vpop.permute.xlu0 %726
    %730 = vset.pattern.permute.xlu0 0
    %731 = vperm.xlu0 %730, %v669
    %v732 = vpop.permute.xlu0 %731
    %735 = vset.pattern.permute.xlu0 0
    %736 = vperm.xlu0 %735, %v670
    %v737 = vpop.permute.xlu0 %736
    %740 = vset.pattern.permute.xlu0 0
    %741 = vperm.xlu0 %740, %v671
    %v742 = vpop.permute.xlu0 %741
    %745 = vset.pattern.permute.xlu0 0
    %746 = vperm.xlu0 %745, %v672
    %v747 = vpop.permute.xlu0 %746
    %750 = vset.pattern.permute.xlu0 0
    %751 = vperm.xlu0 %750, %v673
    %v752 = vpop.permute.xlu0 %751
    %v770 = vunpack.c.l.b16 %v642
    %v771 = vunpack.c.h.b16 %v642
    %v772 = vunpack.c.l.b16 %v643
    %v773 = vunpack.c.h.b16 %v643
    %v774 = vunpack.c.l.b16 %v644
    %v775 = vunpack.c.h.b16 %v644
    %v776 = vunpack.c.l.b16 %v645
    %v777 = vunpack.c.h.b16 %v645
    %v778 = vunpack.c.l.b16 %v646
    %v779 = vunpack.c.h.b16 %v646
    %v780 = vunpack.c.l.b16 %v647
    %v781 = vunpack.c.h.b16 %v647
    %v782 = vunpack.c.l.b16 %v648
    %v783 = vunpack.c.h.b16 %v648
    %v784 = vunpack.c.l.b16 %v649
    %v785 = vunpack.c.h.b16 %v649
    %v786 = vunpack.c.l.b16 %v650
    %v787 = vunpack.c.h.b16 %v650
    %v788 = vunpack.c.l.b16 %v651
    %v789 = vunpack.c.h.b16 %v651
    %v790 = vunpack.c.l.b16 %v652
    %v791 = vunpack.c.h.b16 %v652
    %v792 = vunpack.c.l.b16 %v653
    %v793 = vunpack.c.h.b16 %v653
    %v794 = vunpack.c.l.b16 %v654
    %v795 = vunpack.c.h.b16 %v654
    %v796 = vunpack.c.l.b16 %v655
    %v797 = vunpack.c.h.b16 %v655
    %v798 = vunpack.c.l.b16 %v656
    %v799 = vunpack.c.h.b16 %v656
    %v800 = vunpack.c.l.b16 %v657
    %v801 = vunpack.c.h.b16 %v657
    %v802 = vpack.c.b16 %v772, %v770
    %v803 = vpack.c.b16 %v773, %v771
    %v804 = vpack.c.b16 %v776, %v774
    %v805 = vpack.c.b16 %v777, %v775
    %v806 = vpack.c.b16 %v780, %v778
    %v807 = vpack.c.b16 %v781, %v779
    %v808 = vpack.c.b16 %v784, %v782
    %v809 = vpack.c.b16 %v785, %v783
    %v810 = vpack.c.b16 %v788, %v786
    %v811 = vpack.c.b16 %v789, %v787
    %v812 = vpack.c.b16 %v792, %v790
    %v813 = vpack.c.b16 %v793, %v791
    %v814 = vpack.c.b16 %v796, %v794
    %v815 = vpack.c.b16 %v797, %v795
    %v816 = vpack.c.b16 %v800, %v798
    %v817 = vpack.c.b16 %v801, %v799
    %834 = vmatprep.subr.bf16.mxu0 0
    %835 = vmatpush1.bf16.msra.mxu0 %v626
    %836 = vmatprep.subr.bf16.mxu0 0
    %837 = vmatpush1.bf16.msra.mxu0 %v627
    %838 = vmatprep.subr.bf16.mxu0 0
    %839 = vmatpush1.bf16.msra.mxu0 %v628
    %840 = vmatprep.subr.bf16.mxu0 0
    %841 = vmatpush1.bf16.msra.mxu0 %v629
    %842 = vmatprep.subr.bf16.mxu0 0
    %843 = vmatpush1.bf16.msra.mxu0 %v630
    %844 = vmatprep.subr.bf16.mxu0 0
    %845 = vmatpush1.bf16.msra.mxu0 %v631
    %846 = vmatprep.subr.bf16.mxu0 0
    %847 = vmatpush1.bf16.msra.mxu0 %v632
    %848 = vmatprep.subr.bf16.mxu0 0
    %849 = vmatpush1.bf16.msra.mxu0 %v633
    %850 = vmatprep.subr.bf16.mxu0 0
    %851 = vmatpush1.bf16.msra.mxu0 %v634
    %852 = vmatprep.subr.bf16.mxu0 0
    %853 = vmatpush1.bf16.msra.mxu0 %v635
    %854 = vmatprep.subr.bf16.mxu0 0
    %855 = vmatpush1.bf16.msra.mxu0 %v636
    %856 = vmatprep.subr.bf16.mxu0 0
    %857 = vmatpush1.bf16.msra.mxu0 %v637
    %858 = vmatprep.subr.bf16.mxu0 0
    %859 = vmatpush1.bf16.msra.mxu0 %v638
    %860 = vmatprep.subr.bf16.mxu0 0
    %861 = vmatpush1.bf16.msra.mxu0 %v639
    %862 = vmatprep.subr.bf16.mxu0 0
    %863 = vmatpush1.bf16.msra.mxu0 %v640
    %864 = vmatprep.subr.bf16.mxu0 0
    %865 = vmatpush1.bf16.msra.mxu0 %v641
    %866 = vmatprep.mubr.bf16.mxu0 %v803
    %867 = vmatmul.mubr.bf16.gmra.mrb[0].mxu0 %v802
    %v868 = vpop.f32.mrb[0].mxu0
    %v869 = vadd.f32 %v677, %v868
    %v870 = vpop.f32.mrb[0].mxu0
    %v871 = vpop.f32.mrb[0].mxu0
    %v872 = vadd.f32 %v682, %v871
    %v873 = vpop.f32.mrb[0].mxu0
    %874 = vmatprep.mubr.bf16.mxu0 %v805
    %875 = vmatmul.mubr.bf16.gmra.mrb[0].mxu0 %v804
    %v876 = vpop.f32.mrb[0].mxu0
    %v877 = vadd.f32 %v687, %v876
    %v878 = vpop.f32.mrb[0].mxu0
    %v879 = vpop.f32.mrb[0].mxu0
    %v880 = vadd.f32 %v692, %v879
    %v881 = vpop.f32.mrb[0].mxu0
    %882 = vmatprep.mubr.bf16.mxu0 %v807
    %883 = vmatmul.mubr.bf16.gmra.mrb[0].mxu0 %v806
    %v884 = vpop.f32.mrb[0].mxu0
    %v885 = vadd.f32 %v697, %v884
    %v886 = vpop.f32.mrb[0].mxu0
    %v887 = vpop.f32.mrb[0].mxu0
    %v888 = vadd.f32 %v702, %v887
    %v889 = vpop.f32.mrb[0].mxu0
    %890 = vmatprep.mubr.bf16.mxu0 %v809
    %891 = vmatmul.mubr.bf16.gmra.mrb[0].mxu0 %v808
    %v892 = vpop.f32.mrb[0].mxu0
    %v893 = vadd.f32 %v707, %v892
    %v894 = vpop.f32.mrb[0].mxu0
    %v895 = vpop.f32.mrb[0].mxu0
    %v896 = vadd.f32 %v712, %v895
    %v897 = vpop.f32.mrb[0].mxu0
    %898 = vmatprep.mubr.bf16.mxu0 %v811
    %899 = vmatmul.mubr.bf16.gmra.mrb[0].mxu0 %v810
    %v900 = vpop.f32.mrb[0].mxu0
    %v901 = vadd.f32 %v717, %v900
    %v902 = vpop.f32.mrb[0].mxu0
    %v903 = vpop.f32.mrb[0].mxu0
    %v904 = vadd.f32 %v722, %v903
    %v905 = vpop.f32.mrb[0].mxu0
    %906 = vmatprep.mubr.bf16.mxu0 %v813
    %907 = vmatmul.mubr.bf16.gmra.mrb[0].mxu0 %v812
    %v908 = vpop.f32.mrb[0].mxu0
    %v909 = vadd.f32 %v727, %v908
    %v910 = vpop.f32.mrb[0].mxu0
    %v911 = vpop.f32.mrb[0].mxu0
    %v912 = vadd.f32 %v732, %v911
    %v913 = vpop.f32.mrb[0].mxu0
    %914 = vmatprep.mubr.bf16.mxu0 %v815
    %915 = vmatmul.mubr.bf16.gmra.mrb[0].mxu0 %v814
    %v916 = vpop.f32.mrb[0].mxu0
    %v917 = vadd.f32 %v737, %v916
    %v918 = vpop.f32.mrb[0].mxu0
    %v919 = vpop.f32.mrb[0].mxu0
    %v920 = vadd.f32 %v742, %v919
    %v921 = vpop.f32.mrb[0].mxu0
    %922 = vmatprep.mubr.bf16.mxu0 %v817
    %923 = vmatmul.mubr.bf16.gmra.mrb[0].mxu0 %v816
    %v924 = vpop.f32.mrb[0].mxu0
    %v925 = vadd.f32 %v747, %v924
    %v926 = vpop.f32.mrb[0].mxu0
    %v927 = vpop.f32.mrb[0].mxu0
    %v928 = vadd.f32 %v752, %v927
    %v929 = vpop.f32.mrb[0].mxu0
    %930 = vdwg.mxu0
    %v931 = vmax.f32 %v869, 0.0
    %v932 = vmax.f32 %v872, 0.0
    %v933 = vmax.f32 %v877, 0.0
    %v934 = vmax.f32 %v880, 0.0
    %v935 = vmax.f32 %v885, 0.0
    %v936 = vmax.f32 %v888, 0.0
    %v937 = vmax.f32 %v893, 0.0
    %v938 = vmax.f32 %v896, 0.0
    %v939 = vmax.f32 %v901, 0.0
    %v940 = vmax.f32 %v904, 0.0
    %v941 = vmax.f32 %v909, 0.0
    %v942 = vmax.f32 %v912, 0.0
    %v943 = vmax.f32 %v917, 0.0
    %v944 = vmax.f32 %v920, 0.0
    %v945 = vmax.f32 %v925, 0.0
    %v946 = vmax.f32 %v928, 0.0
    %v947 = vpack.c.bf16 %v932, %v931
    %v948 = vpack.c.bf16 %v934, %v933
    %v949 = vpack.c.bf16 %v936, %v935
    %v950 = vpack.c.bf16 %v938, %v937
    %v951 = vpack.c.bf16 %v940, %v939
    %v952 = vpack.c.bf16 %v942, %v941
    %v953 = vpack.c.bf16 %v944, %v943
    %v954 = vpack.c.bf16 %v946, %v945
    %v955 = vld [vmem:[%s5] sm:$0xf]
    %v956 = vld [vmem:[%s5 + $0x4] sm:$0xf]
    %v957 = vld [vmem:[%s5 + $0x8] sm:$0xf]
    %v958 = vld [vmem:[%s5 + $0xc] sm:$0xf]
    %v959 = vld [vmem:[%s5 + $0x10] sm:$0xf]
    %v960 = vld [vmem:[%s5 + $0x14] sm:$0xf]
    %v961 = vld [vmem:[%s5 + $0x18] sm:$0xf]
    %v962 = vld [vmem:[%s5 + $0x1c] sm:$0xf]
    %v963 = vld [vmem:[%s6] sm:$0xff]
    %v964 = vld [vmem:[%s6 + $0x8] sm:$0xff]
    %v965 = vld [vmem:[%s6 + $0x10] sm:$0xff]
    %v966 = vld [vmem:[%s6 + $0x18] sm:$0xff]
    %v967 = vld [vmem:[%s6 + $0x20] sm:$0xff]
    %v968 = vld [vmem:[%s6 + $0x28] sm:$0xff]
    %v969 = vld [vmem:[%s6 + $0x30] sm:$0xff]
    %v970 = vld [vmem:[%s6 + $0x38] sm:$0xff]
    %972 = vset.pattern.permute.xlu0 0
    %973 = vperm.xlu0 %972, %v963
    %v974 = vpop.permute.xlu0 %973
    %977 = vset.pattern.permute.xlu0 0
    %978 = vperm.xlu0 %977, %v964
    %v979 = vpop.permute.xlu0 %978
    %982 = vset.pattern.permute.xlu0 0
    %983 = vperm.xlu0 %982, %v965
    %v984 = vpop.permute.xlu0 %983
    %987 = vset.pattern.permute.xlu0 0
    %988 = vperm.xlu0 %987, %v966
    %v989 = vpop.permute.xlu0 %988
    %992 = vset.pattern.permute.xlu0 0
    %993 = vperm.xlu0 %992, %v967
    %v994 = vpop.permute.xlu0 %993
    %997 = vset.pattern.permute.xlu0 0
    %998 = vperm.xlu0 %997, %v968
    %v999 = vpop.permute.xlu0 %998
    %1002 = vset.pattern.permute.xlu0 0
    %1003 = vperm.xlu0 %1002, %v969
    %v1004 = vpop.permute.xlu0 %1003
    %1007 = vset.pattern.permute.xlu0 0
    %1008 = vperm.xlu0 %1007, %v970
    %v1009 = vpop.permute.xlu0 %1008
    %v1019 = vunpack.c.l.b16 %v955
    %v1020 = vunpack.c.l.b16 %v956
    %v1021 = vunpack.c.l.b16 %v957
    %v1022 = vunpack.c.l.b16 %v958
    %v1023 = vunpack.c.l.b16 %v959
    %v1024 = vunpack.c.l.b16 %v960
    %v1025 = vunpack.c.l.b16 %v961
    %v1026 = vunpack.c.l.b16 %v962
    %v1027 = vpack.c.b16 %v1020, %v1019
    %v1028 = vpack.c.b16 %v1022, %v1021
    %v1029 = vpack.c.b16 %v1024, %v1023
    %v1030 = vpack.c.b16 %v1026, %v1025
    %1035 = vmatprep.subr.bf16.mxu0 0
    %1036 = vmatpush1.bf16.msra.mxu0 %v947
    %1037 = vmatprep.subr.bf16.mxu0 0
    %1038 = vmatpush1.bf16.msra.mxu0 %v948
    %1039 = vmatprep.subr.bf16.mxu0 0
    %1040 = vmatpush1.bf16.msra.mxu0 %v949
    %1041 = vmatprep.subr.bf16.mxu0 0
    %1042 = vmatpush1.bf16.msra.mxu0 %v950
    %1043 = vmatprep.subr.bf16.mxu0 0
    %1044 = vmatpush1.bf16.msra.mxu0 %v951
    %1045 = vmatprep.subr.bf16.mxu0 0
    %1046 = vmatpush1.bf16.msra.mxu0 %v952
    %1047 = vmatprep.subr.bf16.mxu0 0
    %1048 = vmatpush1.bf16.msra.mxu0 %v953
    %1049 = vmatprep.subr.bf16.mxu0 0
    %1050 = vmatpush1.bf16.msra.mxu0 %v954
    %1051 = vmatprep.subr.bf16.mxu0 0
    %1052 = vmatpush1.bf16.msra.mxu0 0
    %1053 = vmatprep.subr.bf16.mxu0 0
    %1054 = vmatpush1.bf16.msra.mxu0 0
    %1055 = vmatprep.subr.bf16.mxu0 0
    %1056 = vmatpush1.bf16.msra.mxu0 0
    %1057 = vmatprep.subr.bf16.mxu0 0
    %1058 = vmatpush1.bf16.msra.mxu0 0
    %1059 = vmatprep.subr.bf16.mxu0 0
    %1060 = vmatpush1.bf16.msra.mxu0 0
    %1061 = vmatprep.subr.bf16.mxu0 0
    %1062 = vmatpush1.bf16.msra.mxu0 0
    %1063 = vmatprep.subr.bf16.mxu0 0
    %1064 = vmatpush1.bf16.msra.mxu0 0
    %1065 = vmatprep.subr.bf16.mxu0 0
    %1066 = vmatpush1.bf16.msra.mxu0 0
    %1067 = vmatprep.mubr.bf16.mxu0 0
    %1068 = vmatmul.mubr.bf16.gmra.mrb[0].mxu0 %v1027
    %v1069 = vpop.f32.mrb[0].mxu0
    %v1070 = vadd.f32 %v974, %v1069
    %v1071 = vpop.f32.mrb[0].mxu0
    %v1072 = vpop.f32.mrb[0].mxu0
    %v1073 = vadd.f32 %v979, %v1072
    %v1074 = vpop.f32.mrb[0].mxu0
    %1075 = vmatprep.mubr.bf16.mxu0 0
    %1076 = vmatmul.mubr.bf16.gmra.mrb[0].mxu0 %v1028
    %v1077 = vpop.f32.mrb[0].mxu0
    %v1078 = vadd.f32 %v984, %v1077
    %v1079 = vpop.f32.mrb[0].mxu0
    %v1080 = vpop.f32.mrb[0].mxu0
    %v1081 = vadd.f32 %v989, %v1080
    %v1082 = vpop.f32.mrb[0].mxu0
    %1083 = vmatprep.mubr.bf16.mxu0 0
    %1084 = vmatmul.mubr.bf16.gmra.mrb[0].mxu0 %v1029
    %v1085 = vpop.f32.mrb[0].mxu0
    %v1086 = vadd.f32 %v994, %v1085
    %v1087 = vpop.f32.mrb[0].mxu0
    %v1088 = vpop.f32.mrb[0].mxu0
    %v1089 = vadd.f32 %v999, %v1088
    %v1090 = vpop.f32.mrb[0].mxu0
    %1091 = vmatprep.mubr.bf16.mxu0 0
    %1092 = vmatmul.mubr.bf16.gmra.mrb[0].mxu0 %v1030
    %v1093 = vpop.f32.mrb[0].mxu0
    %v1094 = vadd.f32 %v1004, %v1093
    %v1095 = vpop.f32.mrb[0].mxu0
    %v1096 = vpop.f32.mrb[0].mxu0
    %v1097 = vadd.f32 %v1009, %v1096
    %v1098 = vpop.f32.mrb[0].mxu0
    %1099 = vdwg.mxu0
    %v1100 = vmax.f32 %v1070, 0.0
    %v1101 = vmax.f32 %v1073, 0.0
    %v1102 = vmax.f32 %v1078, 0.0
    %v1103 = vmax.f32 %v1081, 0.0
    %v1104 = vmax.f32 %v1086, 0.0
    %v1105 = vmax.f32 %v1089, 0.0
    %v1106 = vmax.f32 %v1094, 0.0
    %v1107 = vmax.f32 %v1097, 0.0
    %v1108 = vpack.c.bf16 %v1101, %v1100
    %v1109 = vpack.c.bf16 %v1103, %v1102
    %v1110 = vpack.c.bf16 %v1105, %v1104
    %v1111 = vpack.c.bf16 %v1107, %v1106
    %v1112 = vld [vmem:[%s7] sm:$0xf]
    %v1113 = vld [vmem:[%s7 + $0x4] sm:$0xf]
    %v1114 = vld [vmem:[%s7 + $0x8] sm:$0xf]
    %v1115 = vld [vmem:[%s7 + $0xc] sm:$0xf]
    %v1116 = vld [vmem:[%s7 + $0x10] sm:$0xf]
    %v1117 = vld [vmem:[%s7 + $0x14] sm:$0xf]
    %v1118 = vld [vmem:[%s7 + $0x18] sm:$0xf]
    %v1119 = vld [vmem:[%s7 + $0x1c] sm:$0xf]
    %v1120 = vld [vmem:[%s8] sm:$0xff]
    %v1121 = vld [vmem:[%s8 + $0x8] sm:$0xff]
    %v1122 = vld [vmem:[%s8 + $0x10] sm:$0xff]
    %v1123 = vld [vmem:[%s8 + $0x18] sm:$0xff]
    %v1124 = vld [vmem:[%s8 + $0x20] sm:$0xff]
    %v1125 = vld [vmem:[%s8 + $0x28] sm:$0xff]
    %v1126 = vld [vmem:[%s8 + $0x30] sm:$0xff]
    %v1127 = vld [vmem:[%s8 + $0x38] sm:$0xff]
    %1129 = vset.pattern.permute.xlu0 0
    %1130 = vperm.xlu0 %1129, %v1120
    %v1131 = vpop.permute.xlu0 %1130
    %1134 = vset.pattern.permute.xlu0 0
    %1135 = vperm.xlu0 %1134, %v1121
    %v1136 = vpop.permute.xlu0 %1135
    %1139 = vset.pattern.permute.xlu0 0
    %1140 = vperm.xlu0 %1139, %v1122
    %v1141 = vpop.permute.xlu0 %1140
    %1144 = vset.pattern.permute.xlu0 0
    %1145 = vperm.xlu0 %1144, %v1123
    %v1146 = vpop.permute.xlu0 %1145
    %1149 = vset.pattern.permute.xlu0 0
    %1150 = vperm.xlu0 %1149, %v1124
    %v1151 = vpop.permute.xlu0 %1150
    %1154 = vset.pattern.permute.xlu0 0
    %1155 = vperm.xlu0 %1154, %v1125
    %v1156 = vpop.permute.xlu0 %1155
    %1159 = vset.pattern.permute.xlu0 0
    %1160 = vperm.xlu0 %1159, %v1126
    %v1161 = vpop.permute.xlu0 %1160
    %1164 = vset.pattern.permute.xlu0 0
    %1165 = vperm.xlu0 %1164, %v1127
    %v1166 = vpop.permute.xlu0 %1165
    %v1176 = vunpack.c.l.b16 %v1112
    %v1177 = vunpack.c.l.b16 %v1113
    %v1178 = vunpack.c.l.b16 %v1114
    %v1179 = vunpack.c.l.b16 %v1115
    %v1180 = vunpack.c.l.b16 %v1116
    %v1181 = vunpack.c.l.b16 %v1117
    %v1182 = vunpack.c.l.b16 %v1118
    %v1183 = vunpack.c.l.b16 %v1119
    %v1184 = vpack.c.b16 %v1177, %v1176
    %v1185 = vpack.c.b16 %v1179, %v1178
    %v1186 = vpack.c.b16 %v1181, %v1180
    %v1187 = vpack.c.b16 %v1183, %v1182
    %v1189 = vsel %vm384, %v1184, 0
    %v1192 = vsel %vm384, %v1185, 0
    %v1195 = vsel %vm384, %v1186, 0
    %v1198 = vsel %vm384, %v1187, 0
    %1200 = vmatprep.subr.bf16.mxu0 0
    %1201 = vmatpush1.bf16.msra.mxu0 %v1108
    %1202 = vmatprep.subr.bf16.mxu0 0
    %1203 = vmatpush1.bf16.msra.mxu0 %v1109
    %1204 = vmatprep.subr.bf16.mxu0 0
    %1205 = vmatpush1.bf16.msra.mxu0 %v1110
    %1206 = vmatprep.subr.bf16.mxu0 0
    %1207 = vmatpush1.bf16.msra.mxu0 %v1111
    %1208 = vmatprep.subr.bf16.mxu0 0
    %1209 = vmatpush1.bf16.msra.mxu0 0
    %1210 = vmatprep.subr.bf16.mxu0 0
    %1211 = vmatpush1.bf16.msra.mxu0 0
    %1212 = vmatprep.subr.bf16.mxu0 0
    %1213 = vmatpush1.bf16.msra.mxu0 0
    %1214 = vmatprep.subr.bf16.mxu0 0
    %1215 = vmatpush1.bf16.msra.mxu0 0
    %1216 = vmatprep.subr.bf16.mxu0 0
    %1217 = vmatpush1.bf16.msra.mxu0 0
    %1218 = vmatprep.subr.bf16.mxu0 0
    %1219 = vmatpush1.bf16.msra.mxu0 0
    %1220 = vmatprep.subr.bf16.mxu0 0
    %1221 = vmatpush1.bf16.msra.mxu0 0
    %1222 = vmatprep.subr.bf16.mxu0 0
    %1223 = vmatpush1.bf16.msra.mxu0 0
    %1224 = vmatprep.subr.bf16.mxu0 0
    %1225 = vmatpush1.bf16.msra.mxu0 0
    %1226 = vmatprep.subr.bf16.mxu0 0
    %1227 = vmatpush1.bf16.msra.mxu0 0
    %1228 = vmatprep.subr.bf16.mxu0 0
    %1229 = vmatpush1.bf16.msra.mxu0 0
    %1230 = vmatprep.subr.bf16.mxu0 0
    %1231 = vmatpush1.bf16.msra.mxu0 0
    %1232 = vmatprep.mubr.bf16.mxu0 0
    %1233 = vmatmul.mubr.bf16.gmra.mrb[0].mxu0 %v1189
    %v1234 = vpop.f32.mrb[0].mxu0
    %v1235 = vadd.f32 %v1131, %v1234
    %v1236 = vpop.f32.mrb[0].mxu0
    %v1237 = vpop.f32.mrb[0].mxu0
    %v1238 = vadd.f32 %v1136, %v1237
    %v1239 = vpop.f32.mrb[0].mxu0
    %1240 = vmatprep.mubr.bf16.mxu0 0
    %1241 = vmatmul.mubr.bf16.gmra.mrb[0].mxu0 %v1192
    %v1242 = vpop.f32.mrb[0].mxu0
    %v1243 = vadd.f32 %v1141, %v1242
    %v1244 = vpop.f32.mrb[0].mxu0
    %v1245 = vpop.f32.mrb[0].mxu0
    %v1246 = vadd.f32 %v1146, %v1245
    %v1247 = vpop.f32.mrb[0].mxu0
    %1248 = vmatprep.mubr.bf16.mxu0 0
    %1249 = vmatmul.mubr.bf16.gmra.mrb[0].mxu0 %v1195
    %v1250 = vpop.f32.mrb[0].mxu0
    %v1251 = vadd.f32 %v1151, %v1250
    %v1252 = vpop.f32.mrb[0].mxu0
    %v1253 = vpop.f32.mrb[0].mxu0
    %v1254 = vadd.f32 %v1156, %v1253
    %v1255 = vpop.f32.mrb[0].mxu0
    %1256 = vmatprep.mubr.bf16.mxu0 0
    %1257 = vmatmul.mubr.bf16.gmra.mrb[0].mxu0 %v1198
    %v1258 = vpop.f32.mrb[0].mxu0
    %v1259 = vadd.f32 %v1161, %v1258
    %v1260 = vpop.f32.mrb[0].mxu0
    %v1261 = vpop.f32.mrb[0].mxu0
    %v1262 = vadd.f32 %v1166, %v1261
    %v1263 = vpop.f32.mrb[0].mxu0
    %1264 = vdwg.mxu0
    %v1265 = vmax.f32 %v1235, 0.0
    %v1266 = vmax.f32 %v1238, 0.0
    %v1267 = vmax.f32 %v1243, 0.0
    %v1268 = vmax.f32 %v1246, 0.0
    %v1269 = vmax.f32 %v1251, 0.0
    %v1270 = vmax.f32 %v1254, 0.0
    %v1271 = vmax.f32 %v1259, 0.0
    %v1272 = vmax.f32 %v1262, 0.0
    %v1273 = vpack.c.bf16 %v1266, %v1265
    %v1274 = vpack.c.bf16 %v1268, %v1267
    %v1275 = vpack.c.bf16 %v1270, %v1269
    %v1276 = vpack.c.bf16 %v1272, %v1271
    %v1277 = vld [vmem:[%s9] sm:$0xf]
    %v1278 = vld [vmem:[%s9 + $0x4] sm:$0xf]
    %v1279 = vld [vmem:[%s9 + $0x8] sm:$0xf]
    %v1280 = vld [vmem:[%s9 + $0xc] sm:$0xf]
    %v1281 = vld [vmem:[%s10] sm:$0xff]
    %v1282 = vld [vmem:[%s10 + $0x8] sm:$0xff]
    %v1283 = vld [vmem:[%s10 + $0x10] sm:$0xff]
    %v1284 = vld [vmem:[%s10 + $0x18] sm:$0xff]
    %1286 = vset.pattern.permute.xlu0 0
    %1287 = vperm.xlu0 %1286, %v1281
    %v1288 = vpop.permute.xlu0 %1287
    %1291 = vset.pattern.permute.xlu0 0
    %1292 = vperm.xlu0 %1291, %v1282
    %v1293 = vpop.permute.xlu0 %1292
    %1296 = vset.pattern.permute.xlu0 0
    %1297 = vperm.xlu0 %1296, %v1283
    %v1298 = vpop.permute.xlu0 %1297
    %1301 = vset.pattern.permute.xlu0 0
    %1302 = vperm.xlu0 %1301, %v1284
    %v1303 = vpop.permute.xlu0 %1302
    %v1309 = vunpack.c.l.b16 %v1277
    %v1310 = vunpack.c.l.b16 %v1278
    %v1311 = vunpack.c.l.b16 %v1279
    %v1312 = vunpack.c.l.b16 %v1280
    %v1313 = vpack.c.b16 %v1310, %v1309
    %v1314 = vpack.c.b16 %v1312, %v1311
    %v1316 = vsel %vm384, %v1313, 0
    %v1319 = vsel %vm384, %v1314, 0
    %1321 = vmatprep.subr.bf16.mxu0 0
    %1322 = vmatpush1.bf16.msra.mxu0 %v1273
    %1323 = vmatprep.subr.bf16.mxu0 0
    %1324 = vmatpush1.bf16.msra.mxu0 %v1274
    %1325 = vmatprep.subr.bf16.mxu0 0
    %1326 = vmatpush1.bf16.msra.mxu0 %v1275
    %1327 = vmatprep.subr.bf16.mxu0 0
    %1328 = vmatpush1.bf16.msra.mxu0 %v1276
    %1329 = vmatprep.subr.bf16.mxu0 0
    %1330 = vmatpush1.bf16.msra.mxu0 0
    %1331 = vmatprep.subr.bf16.mxu0 0
    %1332 = vmatpush1.bf16.msra.mxu0 0
    %1333 = vmatprep.subr.bf16.mxu0 0
    %1334 = vmatpush1.bf16.msra.mxu0 0
    %1335 = vmatprep.subr.bf16.mxu0 0
    %1336 = vmatpush1.bf16.msra.mxu0 0
    %1337 = vmatprep.subr.bf16.mxu0 0
    %1338 = vmatpush1.bf16.msra.mxu0 0
    %1339 = vmatprep.subr.bf16.mxu0 0
    %1340 = vmatpush1.bf16.msra.mxu0 0
    %1341 = vmatprep.subr.bf16.mxu0 0
    %1342 = vmatpush1.bf16.msra.mxu0 0
    %1343 = vmatprep.subr.bf16.mxu0 0
    %1344 = vmatpush1.bf16.msra.mxu0 0
    %1345 = vmatprep.subr.bf16.mxu0 0
    %1346 = vmatpush1.bf16.msra.mxu0 0
    %1347 = vmatprep.subr.bf16.mxu0 0
    %1348 = vmatpush1.bf16.msra.mxu0 0
    %1349 = vmatprep.subr.bf16.mxu0 0
    %1350 = vmatpush1.bf16.msra.mxu0 0
    %1351 = vmatprep.subr.bf16.mxu0 0
    %1352 = vmatpush1.bf16.msra.mxu0 0
    %1353 = vmatprep.mubr.bf16.mxu0 0
    %1354 = vmatmul.mubr.bf16.gmra.mrb[0].mxu0 %v1316
    %v1355 = vpop.f32.mrb[0].mxu0
    %v1356 = vadd.f32 %v1288, %v1355
    %v1357 = vpop.f32.mrb[0].mxu0
    %v1358 = vpop.f32.mrb[0].mxu0
    %v1359 = vadd.f32 %v1293, %v1358
    %v1360 = vpop.f32.mrb[0].mxu0
    %1361 = vmatprep.mubr.bf16.mxu0 0
    %1362 = vmatmul.mubr.bf16.gmra.mrb[0].mxu0 %v1319
    %v1363 = vpop.f32.mrb[0].mxu0
    %v1364 = vadd.f32 %v1298, %v1363
    %v1365 = vpop.f32.mrb[0].mxu0
    %v1366 = vpop.f32.mrb[0].mxu0
    %v1367 = vadd.f32 %v1303, %v1366
    %v1368 = vpop.f32.mrb[0].mxu0
    %1369 = vdwg.mxu0
    %v1370 = vmax.f32 %v1356, 0.0
    %v1371 = vmax.f32 %v1359, 0.0
    %v1372 = vmax.f32 %v1364, 0.0
    %v1373 = vmax.f32 %v1367, 0.0
    %v1374 = vpack.c.bf16 %v1371, %v1370
    %v1375 = vpack.c.bf16 %v1373, %v1372
    %v1376 = vld [vmem:[%s11] sm:$0x1]
    %v1377 = vld [vmem:[#allocation2] sm:$0x1]
    %1379 = vset.pattern.permute.xlu0 0
    %1380 = vperm.xlu0 %1379, %v1377
    %v1381 = vpop.permute.xlu0 %1380
    %v1383 = vlaneseq
    %v1384 = vshrl.u32 %v1383, 7
    %v1385 = vsub.s32 0, %v1384
    %v1386 = vrot.slane %v1381, %v1385
    %vm1387 = vcmask 261120
    %v1389 = vsel %vm1387, %v1376, 0
    %1391 = vmatprep.subr.bf16.mxu0 0
    %1392 = vmatpush1.bf16.msra.mxu0 %v1374
    %1393 = vmatprep.subr.bf16.mxu0 0
    %1394 = vmatpush1.bf16.msra.mxu0 %v1375
    %1395 = vmatprep.subr.bf16.mxu0 0
    %1396 = vmatpush1.bf16.msra.mxu0 0
    %1397 = vmatprep.subr.bf16.mxu0 0
    %1398 = vmatpush1.bf16.msra.mxu0 0
    %1399 = vmatprep.subr.bf16.mxu0 0
    %1400 = vmatpush1.bf16.msra.mxu0 0
    %1401 = vmatprep.subr.bf16.mxu0 0
    %1402 = vmatpush1.bf16.msra.mxu0 0
    %1403 = vmatprep.subr.bf16.mxu0 0
    %1404 = vmatpush1.bf16.msra.mxu0 0
    %1405 = vmatprep.subr.bf16.mxu0 0
    %1406 = vmatpush1.bf16.msra.mxu0 0
    %1407 = vmatprep.subr.bf16.mxu0 0
    %1408 = vmatpush1.bf16.msra.mxu0 0
    %1409 = vmatprep.subr.bf16.mxu0 0
    %1410 = vmatpush1.bf16.msra.mxu0 0
    %1411 = vmatprep.subr.bf16.mxu0 0
    %1412 = vmatpush1.bf16.msra.mxu0 0
    %1413 = vmatprep.subr.bf16.mxu0 0
    %1414 = vmatpush1.bf16.msra.mxu0 0
    %1415 = vmatprep.subr.bf16.mxu0 0
    %1416 = vmatpush1.bf16.msra.mxu0 0
    %1417 = vmatprep.subr.bf16.mxu0 0
    %1418 = vmatpush1.bf16.msra.mxu0 0
    %1419 = vmatprep.subr.bf16.mxu0 0
    %1420 = vmatpush1.bf16.msra.mxu0 0
    %1421 = vmatprep.subr.bf16.mxu0 0
    %1422 = vmatpush1.bf16.msra.mxu0 0
    %1423 = vmatprep.mubr.bf16.mxu0 0
    %1424 = vmatmul.mubr.bf16.gmra.mrb[0].mxu0 %v1389
    %v1425 = vpop.f32.mrb[0].mxu0
    %v1426 = vadd.f32 %v1386, %v1425
    %v1427 = vpop.f32.mrb[0].mxu0
    %v1428 = vpop.f32.mrb[0].mxu0
    %v1429 = vpop.f32.mrb[0].mxu0
    %1430 = vdwg.mxu0
    %1431 = vst [vmem:[#allocation3] sm:$0x1] %v1426
    // Predicated region
    $region54: #{tpu_custom_call.1} parent=1 // pred_check
      _
    $region55: #{tpu_custom_call.1} parent=1 // pred_check_branch
      %1433 = sbr.rel (0) target = $region57
    $region56: #{tpu_custom_call.1} parent=1 // pred_region
      %s1435 = ssub.s32 16, 16
      %1436 = vsyncadd [#allocation4], %s1435
      %s1438 = sshll.u32 [#allocation3], 4
      %s1439 = int_to_ptr.vmem [resolvable:$true] %s1438
      %1441 = dma.vmem_to_hbm [thread:$0]  %s1439, 16, %s13, [#allocation4]
    $region57: #{tpu_custom_call.1} parent=1 // pred_fallthru
      _
    // Predicated region
    $region58: #{tpu_custom_call.1} parent=1 // pred_check
      _
    $region59: #{tpu_custom_call.1} parent=1 // pred_check_branch
      %1443 = sbr.rel (0) target = $region61
    $region60: #{tpu_custom_call.1} parent=1 // pred_region
      %1444 = dma.done [#allocation4], 16
    $region61: #{tpu_custom_call.1} parent=1 // pred_fallthru
      _
    %1445 = vsyncpa [#allocation4], 1

</llo_original>
